<compile_context>
chip_gen: v7x
topology: tpu7x:2x2x1
jax: 0.10.0
libtpu: 0.0.40
codegen_flags: <defaults>
</compile_context>

<pallas_src>
import jax
import jax.numpy as jnp
from jax.experimental import pallas as pl
from jax.experimental.pallas import tpu as pltpu

IN_CH = 4
OUT_CH = 20
GROUPS = 4
OC_PER_G = OUT_CH // GROUPS  # 5
KH = KW = 3


def grouped_conv2d(x, w):
    """x: (N, 4, H, W) f32;  w: (20, 1, 3, 3) f32  ->  (N, 20, H-2, W-2)."""
    N, C, H, W = x.shape
    assert C == IN_CH
    OH, OW = H - (KH - 1), W - (KW - 1)
    HW = H * W

    # ---- wrapper-side layout plumbing (outside the kernel, tiny data) ------
    # x_rep[:, oc] == x[:, oc // OC_PER_G]; spatial flattened so the last
    # (lane) dim is H*W  -> lane-dense loads/stores inside the kernel.
    x_rep = jnp.repeat(x, OC_PER_G, axis=1).reshape(N, OUT_CH, HW)
    # Weights as (tap, out_channel, 1): w_taps[di*KW+dj, oc, 0] = w[oc,0,di,dj]
    w_taps = jnp.transpose(w.reshape(OUT_CH, KH * KW), (1, 0))[:, :, None]

    def kernel(w_ref, x_ref, o_ref):
        # w_ref: VMEM (KH*KW, OUT_CH, 1)
        # x_ref: VMEM (1, OUT_CH, HW)   -- one batch image, channels repeated
        # o_ref: VMEM (1, OUT_CH, HW)
        xch = x_ref[0]                                  # (OUT_CH, HW) f32
        acc = jnp.zeros(xch.shape, jnp.float32)
        for di in range(KH):
            for dj in range(KW):
                t = di * KW + dj
                s = di * W + dj
                if s == 0:
                    xs = xch
                else:
                    # roll "left" by s: flat position p now holds x[p + s]
                    xs = pltpu.roll(xch, shift=HW - s, axis=1)
                acc = acc + w_ref[t] * xs               # (20,1)*(20,HW) FMA
        o_ref[0] = acc.astype(o_ref.dtype)

    out_flat = pl.pallas_call(
        kernel,
        out_shape=jax.ShapeDtypeStruct((N, OUT_CH, HW), x.dtype),
        grid=(N,),
        in_specs=[
            pl.BlockSpec((KH * KW, OUT_CH, 1), lambda n: (0, 0, 0)),
            pl.BlockSpec((1, OUT_CH, HW), lambda n: (n, 0, 0)),
        ],
        out_specs=pl.BlockSpec((1, OUT_CH, HW), lambda n: (n, 0, 0)),
        compiler_params=pltpu.CompilerParams(
            dimension_semantics=("parallel",)),
    )(w_taps, x_rep)

    # Valid-conv results live at flat positions i*W + j with i<OH, j<OW;
    # the wrap-around tail from the rolls is sliced off here.
    return out_flat.reshape(N, OUT_CH, H, W)[:, :, :OH, :OW]


if __name__ == "__main__":
    key = jax.random.PRNGKey(0)
    kx, kw = jax.random.split(key)

    N, H, W = 2, 16, 16
    x = jax.random.normal(kx, (N, IN_CH, H, W), dtype=jnp.float32)
    w = jax.random.normal(kw, (OUT_CH, 1, KH, KW), dtype=jnp.float32) * 0.1

    out = grouped_conv2d(x, w)
    out = jax.block_until_ready(out)

    # Reference: XLA grouped convolution (semantics of nn.Conv2d(..., groups=4))
    ref = jax.lax.conv_general_dilated(
        x, w, window_strides=(1, 1), padding="VALID",
        dimension_numbers=("NCHW", "OIHW", "NCHW"),
        feature_group_count=GROUPS)
    assert out.shape == (N, OUT_CH, H - 2, W - 2)
    assert jnp.allclose(out, ref, atol=1e-4, rtol=1e-4)

    print("KERNEL_OK")
</pallas_src>

<mosaic_0001>
module attributes {stable_mosaic.version = 11 : i64} {
  func.func @kernel(%arg0: i32, %arg1: memref<9x20x1xf32, #tpu.memory_space<vmem>>, %arg2: memref<1x20x256xf32, #tpu.memory_space<vmem>>, %arg3: memref<1x20x256xf32, #tpu.memory_space<vmem>>) attributes {dimension_semantics = [#tpu.dimension_semantics<parallel>], iteration_bounds = array<i64: 2>, scalar_prefetch = 0 : i64, scratch_operands = 0 : i64, tpu.core_type = #tpu.core_type<tc>, window_params = [{pipeline_mode = #tpu.pipeline_mode<synchronous>, transform_indices = @transform_0, window_bounds = array<i64: 9, 20, 1>}, {transform_indices = @transform_1, window_bounds = array<i64: 1, 20, 256>}, {transform_indices = @transform_2, window_bounds = array<i64: 1, 20, 256>}]} {
    %c0 = arith.constant 0 : index
    %c0_0 = arith.constant 0 : index
    %c0_1 = arith.constant 0 : index
    %0 = vector.load %arg2[%c0, %c0_0, %c0_1] : memref<1x20x256xf32, #tpu.memory_space<vmem>>, vector<1x20x256xf32>
    %1 = vector.shape_cast %0 : vector<1x20x256xf32> to vector<20x256xf32>
    %cst = arith.constant 0.000000e+00 : f32
    %2 = vector.broadcast %cst : f32 to vector<20x256xf32>
    %c0_2 = arith.constant 0 : index
    %c0_3 = arith.constant 0 : index
    %c0_4 = arith.constant 0 : index
    %3 = vector.load %arg1[%c0_2, %c0_3, %c0_4] : memref<9x20x1xf32, #tpu.memory_space<vmem>>, vector<1x20x1xf32>
    %4 = vector.shape_cast %3 : vector<1x20x1xf32> to vector<20x1xf32>
    %5 = vector.broadcast %4 : vector<20x1xf32> to vector<20x256xf32>
    %6 = arith.mulf %5, %1 : vector<20x256xf32>
    %7 = arith.addf %2, %6 : vector<20x256xf32>
    %c255_i32 = arith.constant 255 : i32
    %8 = tpu.dynamic_rotate %1 by %c255_i32 dim 1 : vector<20x256xf32>, i32 -> vector<20x256xf32>
    %c1 = arith.constant 1 : index
    %c0_5 = arith.constant 0 : index
    %c0_6 = arith.constant 0 : index
    %9 = vector.load %arg1[%c1, %c0_5, %c0_6] : memref<9x20x1xf32, #tpu.memory_space<vmem>>, vector<1x20x1xf32>
    %10 = vector.shape_cast %9 : vector<1x20x1xf32> to vector<20x1xf32>
    %11 = vector.broadcast %10 : vector<20x1xf32> to vector<20x256xf32>
    %12 = arith.mulf %11, %8 : vector<20x256xf32>
    %13 = arith.addf %7, %12 : vector<20x256xf32>
    %c254_i32 = arith.constant 254 : i32
    %14 = tpu.dynamic_rotate %1 by %c254_i32 dim 1 : vector<20x256xf32>, i32 -> vector<20x256xf32>
    %c2 = arith.constant 2 : index
    %c0_7 = arith.constant 0 : index
    %c0_8 = arith.constant 0 : index
    %15 = vector.load %arg1[%c2, %c0_7, %c0_8] : memref<9x20x1xf32, #tpu.memory_space<vmem>>, vector<1x20x1xf32>
    %16 = vector.shape_cast %15 : vector<1x20x1xf32> to vector<20x1xf32>
    %17 = vector.broadcast %16 : vector<20x1xf32> to vector<20x256xf32>
    %18 = arith.mulf %17, %14 : vector<20x256xf32>
    %19 = arith.addf %13, %18 : vector<20x256xf32>
    %c240_i32 = arith.constant 240 : i32
    %20 = tpu.dynamic_rotate %1 by %c240_i32 dim 1 : vector<20x256xf32>, i32 -> vector<20x256xf32>
    %c3 = arith.constant 3 : index
    %c0_9 = arith.constant 0 : index
    %c0_10 = arith.constant 0 : index
    %21 = vector.load %arg1[%c3, %c0_9, %c0_10] : memref<9x20x1xf32, #tpu.memory_space<vmem>>, vector<1x20x1xf32>
    %22 = vector.shape_cast %21 : vector<1x20x1xf32> to vector<20x1xf32>
    %23 = vector.broadcast %22 : vector<20x1xf32> to vector<20x256xf32>
    %24 = arith.mulf %23, %20 : vector<20x256xf32>
    %25 = arith.addf %19, %24 : vector<20x256xf32>
    %c239_i32 = arith.constant 239 : i32
    %26 = tpu.dynamic_rotate %1 by %c239_i32 dim 1 : vector<20x256xf32>, i32 -> vector<20x256xf32>
    %c4 = arith.constant 4 : index
    %c0_11 = arith.constant 0 : index
    %c0_12 = arith.constant 0 : index
    %27 = vector.load %arg1[%c4, %c0_11, %c0_12] : memref<9x20x1xf32, #tpu.memory_space<vmem>>, vector<1x20x1xf32>
    %28 = vector.shape_cast %27 : vector<1x20x1xf32> to vector<20x1xf32>
    %29 = vector.broadcast %28 : vector<20x1xf32> to vector<20x256xf32>
    %30 = arith.mulf %29, %26 : vector<20x256xf32>
    %31 = arith.addf %25, %30 : vector<20x256xf32>
    %c238_i32 = arith.constant 238 : i32
    %32 = tpu.dynamic_rotate %1 by %c238_i32 dim 1 : vector<20x256xf32>, i32 -> vector<20x256xf32>
    %c5 = arith.constant 5 : index
    %c0_13 = arith.constant 0 : index
    %c0_14 = arith.constant 0 : index
    %33 = vector.load %arg1[%c5, %c0_13, %c0_14] : memref<9x20x1xf32, #tpu.memory_space<vmem>>, vector<1x20x1xf32>
    %34 = vector.shape_cast %33 : vector<1x20x1xf32> to vector<20x1xf32>
    %35 = vector.broadcast %34 : vector<20x1xf32> to vector<20x256xf32>
    %36 = arith.mulf %35, %32 : vector<20x256xf32>
    %37 = arith.addf %31, %36 : vector<20x256xf32>
    %c224_i32 = arith.constant 224 : i32
    %38 = tpu.dynamic_rotate %1 by %c224_i32 dim 1 : vector<20x256xf32>, i32 -> vector<20x256xf32>
    %c6 = arith.constant 6 : index
    %c0_15 = arith.constant 0 : index
    %c0_16 = arith.constant 0 : index
    %39 = vector.load %arg1[%c6, %c0_15, %c0_16] : memref<9x20x1xf32, #tpu.memory_space<vmem>>, vector<1x20x1xf32>
    %40 = vector.shape_cast %39 : vector<1x20x1xf32> to vector<20x1xf32>
    %41 = vector.broadcast %40 : vector<20x1xf32> to vector<20x256xf32>
    %42 = arith.mulf %41, %38 : vector<20x256xf32>
    %43 = arith.addf %37, %42 : vector<20x256xf32>
    %c223_i32 = arith.constant 223 : i32
    %44 = tpu.dynamic_rotate %1 by %c223_i32 dim 1 : vector<20x256xf32>, i32 -> vector<20x256xf32>
    %c7 = arith.constant 7 : index
    %c0_17 = arith.constant 0 : index
    %c0_18 = arith.constant 0 : index
    %45 = vector.load %arg1[%c7, %c0_17, %c0_18] : memref<9x20x1xf32, #tpu.memory_space<vmem>>, vector<1x20x1xf32>
    %46 = vector.shape_cast %45 : vector<1x20x1xf32> to vector<20x1xf32>
    %47 = vector.broadcast %46 : vector<20x1xf32> to vector<20x256xf32>
    %48 = arith.mulf %47, %44 : vector<20x256xf32>
    %49 = arith.addf %43, %48 : vector<20x256xf32>
    %c222_i32 = arith.constant 222 : i32
    %50 = tpu.dynamic_rotate %1 by %c222_i32 dim 1 : vector<20x256xf32>, i32 -> vector<20x256xf32>
    %c8 = arith.constant 8 : index
    %c0_19 = arith.constant 0 : index
    %c0_20 = arith.constant 0 : index
    %51 = vector.load %arg1[%c8, %c0_19, %c0_20] : memref<9x20x1xf32, #tpu.memory_space<vmem>>, vector<1x20x1xf32>
    %52 = vector.shape_cast %51 : vector<1x20x1xf32> to vector<20x1xf32>
    %53 = vector.broadcast %52 : vector<20x1xf32> to vector<20x256xf32>
    %54 = arith.mulf %53, %50 : vector<20x256xf32>
    %55 = arith.addf %49, %54 : vector<20x256xf32>
    %c0_21 = arith.constant 0 : index
    %c0_22 = arith.constant 0 : index
    %c0_23 = arith.constant 0 : index
    %56 = vector.load %arg3[%c0_21, %c0_22, %c0_23] : memref<1x20x256xf32, #tpu.memory_space<vmem>>, vector<1x20x256xf32>
    %57 = vector.shape_cast %56 : vector<1x20x256xf32> to vector<20x256xf32>
    %58 = vector.shape_cast %55 : vector<20x256xf32> to vector<1x20x256xf32>
    tpu.vector_store %arg3[%c0_21, %c0_22, %c0_23], %58 {strides = array<i32>} : memref<1x20x256xf32, #tpu.memory_space<vmem>>, vector<1x20x256xf32>,
    return
  }
  func.func @transform_0(%arg0: i32) -> (i32, i32, i32) {
    %c0_i32 = arith.constant 0 : i32
    %c0_i32_0 = arith.constant 0 : i32
    %c0_i32_1 = arith.constant 0 : i32
    %c0_i32_2 = arith.constant 0 : i32
    return %c0_i32, %c0_i32_0, %c0_i32_1 : i32, i32, i32
  }
  func.func @transform_1(%arg0: i32) -> (i32, i32, i32) {
    %c0_i32 = arith.constant 0 : i32
    %c0_i32_0 = arith.constant 0 : i32
    %c0_i32_1 = arith.constant 0 : i32
    return %arg0, %c0_i32, %c0_i32_0 : i32, i32, i32
  }
  func.func @transform_2(%arg0: i32) -> (i32, i32, i32) {
    %c0_i32 = arith.constant 0 : i32
    %c0_i32_0 = arith.constant 0 : i32
    %c0_i32_1 = arith.constant 0 : i32
    return %arg0, %c0_i32, %c0_i32_0 : i32, i32, i32
  }
}

</mosaic_0001>

<llo_original>
// kernel: tpu_custom_call.1
$region0: #{tpu_custom_call.1}
  #allocation0 [shape = 'u32[]', space=smem, size = 0x4, offset = 0x4, fixed_abs, tag = 'smem constant byte address 0x4 - core index']
  #allocation1 [shape = 'u32[144,128]{1,0:T(1,128)}', space=vmem, size = 0x12000, scoped, tag = 'internal scratch']
  %s0 = inlined_call_operand.vmem [shape: f32[9,20,1], index: 0, kind: input, shape index: {}]
  %s1 = inlined_call_operand.vmem [shape: f32[2,20,256], index: 1, kind: input, shape index: {}]
  %s2 = inlined_call_operand.vmem [shape: f32[2,20,256], index: 2, kind: output, shape index: {}]
  %s3 = sld [smem:[#allocation0]]
  $region41: #{tpu_custom_call.1} parent=0
    _
  %s5 = ssub.s32 1, %s3
  %s6 = scalar_select 0, %s5, %s3
  loop: start=0, step=1, limit=4
  $region2: #{tpu_custom_call.1} parent=0 // loop_pre_header
    _
  $region3: #{tpu_custom_call.1} parent=0 // loop_header
    %s8 = sphi 0, %s12
    %p9 = scmp.ge.s32.totalorder %s8, 4
    %s16 = sphi 0, %s16
    %s18 = sphi 0, %s16
    %s19 = sphi 0, %s18
    %s33 = sphi 0, %s19
    %s39 = sphi 0, %s41
    %s42 = sphi 0, %s39
    %s43 = sphi 0, %s42
    %s59 = sphi 0, %s43
    %s65 = sphi 0, %s67
    %s68 = sphi 0, %s65
    %s69 = sphi 0, %s68
    %s85 = sphi 0, %s69
  $region4: #{tpu_custom_call.1} parent=0 // loop_header_branch
    %11 = sbr.rel (%p9) target = $region8
  $region5: #{tpu_custom_call.1} parent=0 // loop_body
    %s13 = ssub.s32 %s8, 1
    %s14 = ssub.s32 %s8, 2
    %s15 = sadd.s32 %s8, 1
    %s17 = sadd.s32 %s16, 1
    %p20 = scmp.eq.s32.totalorder %s8, 1
    %p21 = scmp.ne.s32.totalorder %s16, %s18
    %p22 = scmp.eq.s32.totalorder %s8, 0
    %p23 = por %p21, %p22
    %p24 = scmp.ne.s32.totalorder %s16, %s18
    %p25 = scmp.eq.s32.totalorder %s13, 1
    %p26 = por %p24, %p25
    %p27 = scmp.ne.s32.totalorder %s18, %s19
    %p28 = scmp.eq.s32.totalorder %s13, 0
    %p29 = por %p27, %p28
    %p30 = scmp.ne.s32.totalorder %s18, %s19
    %p31 = scmp.eq.s32.totalorder %s14, 1
    %p32 = por %p30, %p31
    %p34 = scmp.ne.s32.totalorder %s19, %s33
    %p35 = scmp.eq.s32.totalorder %s14, 0
    %p36 = por %p34, %p35
    %s37 = ssub.s32 %s8, %s15
    %p38 = scmp.eq.s32.totalorder %s37, 0
    %s40 = sadd.s32 %s39, 1
    %s41 = scalar_select %p38, %s39, %s40
    %p44 = pneg %p38
    %p45 = scmp.eq.s32.totalorder %s8, 1
    %p46 = por %p44, %p45
    %p47 = scmp.ne.s32.totalorder %s39, %s42
    %p48 = scmp.eq.s32.totalorder %s8, 0
    %p49 = por %p47, %p48
    %p50 = scmp.ne.s32.totalorder %s39, %s42
    %p51 = scmp.eq.s32.totalorder %s13, 1
    %p52 = por %p50, %p51
    %p53 = scmp.ne.s32.totalorder %s42, %s43
    %p54 = scmp.eq.s32.totalorder %s13, 0
    %p55 = por %p53, %p54
    %p56 = scmp.ne.s32.totalorder %s42, %s43
    %p57 = scmp.eq.s32.totalorder %s14, 1
    %p58 = por %p56, %p57
    %p60 = scmp.ne.s32.totalorder %s43, %s59
    %p61 = scmp.eq.s32.totalorder %s14, 0
    %p62 = por %p60, %p61
    %s63 = ssub.s32 %s8, %s15
    %p64 = scmp.eq.s32.totalorder %s63, 0
    %s66 = sadd.s32 %s65, 1
    %s67 = scalar_select %p64, %s65, %s66
    %p70 = pneg %p64
    %p71 = scmp.eq.s32.totalorder %s8, 1
    %p72 = por %p70, %p71
    %p73 = scmp.ne.s32.totalorder %s65, %s68
    %p74 = scmp.eq.s32.totalorder %s8, 0
    %p75 = por %p73, %p74
    %p76 = scmp.ne.s32.totalorder %s65, %s68
    %p77 = scmp.eq.s32.totalorder %s13, 1
    %p78 = por %p76, %p77
    %p79 = scmp.ne.s32.totalorder %s68, %s69
    %p80 = scmp.eq.s32.totalorder %s13, 0
    %p81 = por %p79, %p80
    %p82 = scmp.ne.s32.totalorder %s68, %s69
    %p83 = scmp.eq.s32.totalorder %s14, 1
    %p84 = por %p82, %p83
    %p86 = scmp.ne.s32.totalorder %s69, %s85
    %p87 = scmp.eq.s32.totalorder %s14, 0
    %p88 = por %p86, %p87
    %p89 = scmp.le.s32.totalorder 1, %s8
    %p90 = scmp.lt.s32.totalorder %s8, 3
    %p91 = pnand %p89, %p90
    %p92 = pneg %p91
    // Predicated region
    $region9: #{tpu_custom_call.1} parent=5 // pred_check
      _
    $region10: #{tpu_custom_call.1} parent=5 // pred_check_branch
      %94 = sbr.rel (%p91) target = $region12
    $region11: #{tpu_custom_call.1} parent=5 // pred_region
      %s95 = ssub.s32 %s8, 1
      // Predicated region
      $region13: #{tpu_custom_call.1} parent=11 // pred_check
        %p96 = pneg %p29
      $region14: #{tpu_custom_call.1} parent=11 // pred_check_branch
        %98 = sbr.rel (%p96) target = $region16
      $region15: #{tpu_custom_call.1} parent=11 // pred_region
        _
      $region16: #{tpu_custom_call.1} parent=11 // pred_fallthru
        _
    $region12: #{tpu_custom_call.1} parent=5 // pred_fallthru
      _
    %p99 = scmp.lt.s32.totalorder %s8, 2
    // Predicated region
    $region17: #{tpu_custom_call.1} parent=5 // pred_check
      %p100 = pneg %p99
    $region18: #{tpu_custom_call.1} parent=5 // pred_check_branch
      %102 = sbr.rel (%p100) target = $region20
    $region19: #{tpu_custom_call.1} parent=5 // pred_region
      // Predicated region
      $region21: #{tpu_custom_call.1} parent=19 // pred_check
        %p103 = pneg %p49
      $region22: #{tpu_custom_call.1} parent=19 // pred_check_branch
        %105 = sbr.rel (%p103) target = $region24
      $region23: #{tpu_custom_call.1} parent=19 // pred_region
        %p106 = scmp.lt.s32.totalorder %s8, 1
        %s107 = scalar_select %p106, %s8, 1
        %s108 = smul.addr %s107, 6
        %s109 = smul.addr %s108, 8
        %s110 = scalar_lea.vmem %s1, %s109
      $region24: #{tpu_custom_call.1} parent=19 // pred_fallthru
        _
    $region20: #{tpu_custom_call.1} parent=5 // pred_fallthru
      _
    %p111 = scmp.le.s32.totalorder 1, %s8
    %p112 = scmp.lt.s32.totalorder %s8, 3
    %p113 = pnand %p111, %p112
    %p114 = pneg %p113
    // Predicated region
    $region25: #{tpu_custom_call.1} parent=5 // pred_check
      _
    $region26: #{tpu_custom_call.1} parent=5 // pred_check_branch
      %116 = sbr.rel (%p113) target = $region28
    $region27: #{tpu_custom_call.1} parent=5 // pred_region
      %s117 = ssub.s32 %s8, 1
      %p118 = pneg %p29
      %p119 = pneg %p26
      %p120 = scmp.lt.s32.totalorder %s13, 1
      %s121 = scalar_select %p120, %s13, 1
      %s122 = smul.addr %s121, 6
      %s123 = smul.addr %s122, 8
      %s124 = scalar_lea.vmem %s1, %s123
      %p125 = pneg %p55
      %p126 = pneg %p52
      %p127 = pneg %p81
      %p128 = pneg %p78
      %p129 = scmp.lt.s32.totalorder %s13, 1
      %s130 = scalar_select %p129, %s13, 1
      %s131 = smul.addr %s130, 6
      %s132 = smul.addr %s131, 8
      %s133 = scalar_lea.vmem %s2, %s132
      %p134 = scmp.lt.s32.totalorder %s13, 1
      %s135 = scalar_select %p134, %s13, 1
      %s136 = smul.addr %s135, 6
      %s137 = smul.addr %s136, 8
      %s138 = scalar_lea.vmem %s1, %s137
      %p139 = scmp.lt.s32.totalorder %s13, 1
      %s140 = scalar_select %p139, %s13, 1
      %s141 = smul.addr %s140, 6
      %s142 = smul.addr %s141, 8
      %s143 = scalar_lea.vmem %s2, %s142
      %v144 = vld [vmem:[%s138] sm:$0xff]
      %v145 = vld [vmem:[%s138 + $0x8] sm:$0xff]
      %v146 = vld [vmem:[%s138 + $0x10] sm:$0xff]
      %v147 = vld [vmem:[%s138 + $0x18] sm:$0xff]
      %v148 = vld [vmem:[%s138 + $0x20] sm:$0xf]
      %v149 = vld [vmem:[%s138 + $0x28] sm:$0xf]
      %v150 = vld [vmem:[%s0] sm:$0xff]
      %v151 = vld [vmem:[%s0 + $0x8] sm:$0xff]
      %v152 = vld [vmem:[%s0 + $0x10] sm:$0xf]
      %154 = vset.pattern.permute.xlu0 0
      %155 = vperm.xlu0 %154, %v150
      %v156 = vpop.permute.xlu0 %155
      %159 = vset.pattern.permute.xlu0 0
      %160 = vperm.xlu0 %159, %v151
      %v161 = vpop.permute.xlu0 %160
      %164 = vset.pattern.permute.xlu0 0
      %165 = vperm.xlu0 %164, %v152
      %v166 = vpop.permute.xlu0 %165
      %v168 = vmul.f32 %v156, %v144
      %v169 = vmul.f32 %v156, %v145
      %v170 = vmul.f32 %v161, %v146
      %v171 = vmul.f32 %v161, %v147
      %v172 = vmul.f32 %v166, %v148
      %v173 = vmul.f32 %v166, %v149
      %v174 = vadd.f32 %v168, 0.0
      %v175 = vadd.f32 %v169, 0.0
      %v176 = vadd.f32 %v170, 0.0
      %v177 = vadd.f32 %v171, 0.0
      %v178 = vadd.f32 %v172, 0.0
      %v179 = vadd.f32 %v173, 0.0
      %180 = vrot.lane.b32.xlu0 %v144, 127
      %v181 = vpop.permute.xlu0 %180
      %182 = vrot.lane.b32.xlu0 %v146, 127
      %v183 = vpop.permute.xlu0 %182
      %184 = vrot.lane.b32.xlu0 %v148, 127
      %v185 = vpop.permute.xlu0 %184
      %186 = vrot.lane.b32.xlu0 %v145, 127
      %v187 = vpop.permute.xlu0 %186
      %188 = vrot.lane.b32.xlu0 %v147, 127
      %v189 = vpop.permute.xlu0 %188
      %190 = vrot.lane.b32.xlu0 %v149, 127
      %v191 = vpop.permute.xlu0 %190
      %v192 = vlaneseq
      %v193 = vand.u32 %v192, 127
      %vm194 = vcmp.lt.s32.totalorder %v193, 127
      %v195 = vsel %vm194, %v181, %v187
      %v196 = vsel %vm194, %v183, %v189
      %v197 = vsel %vm194, %v185, %v191
      %v198 = vsel %vm194, %v187, %v181
      %v199 = vsel %vm194, %v189, %v183
      %v200 = vsel %vm194, %v191, %v185
      %s201 = scalar_lea.vmem %s0, 24
      %v202 = vld [vmem:[%s201] sm:$0xff]
      %v203 = vld [vmem:[%s201 + $0x8] sm:$0xff]
      %v204 = vld [vmem:[%s201 + $0x10] sm:$0xf]
      %206 = vset.pattern.permute.xlu0 0
      %207 = vperm.xlu0 %206, %v202
      %v208 = vpop.permute.xlu0 %207
      %211 = vset.pattern.permute.xlu0 0
      %212 = vperm.xlu0 %211, %v203
      %v213 = vpop.permute.xlu0 %212
      %216 = vset.pattern.permute.xlu0 0
      %217 = vperm.xlu0 %216, %v204
      %v218 = vpop.permute.xlu0 %217
      %v220 = vmul.f32 %v208, %v195
      %v221 = vmul.f32 %v208, %v198
      %v222 = vmul.f32 %v213, %v196
      %v223 = vmul.f32 %v213, %v199
      %v224 = vmul.f32 %v218, %v197
      %v225 = vmul.f32 %v218, %v200
      %v226 = vadd.f32 %v174, %v220
      %v227 = vadd.f32 %v175, %v221
      %v228 = vadd.f32 %v176, %v222
      %v229 = vadd.f32 %v177, %v223
      %v230 = vadd.f32 %v178, %v224
      %v231 = vadd.f32 %v179, %v225
      %232 = vrot.lane.b32.xlu0 %v144, 126
      %v233 = vpop.permute.xlu0 %232
      %234 = vrot.lane.b32.xlu0 %v146, 126
      %v235 = vpop.permute.xlu0 %234
      %236 = vrot.lane.b32.xlu0 %v148, 126
      %v237 = vpop.permute.xlu0 %236
      %238 = vrot.lane.b32.xlu0 %v145, 126
      %v239 = vpop.permute.xlu0 %238
      %240 = vrot.lane.b32.xlu0 %v147, 126
      %v241 = vpop.permute.xlu0 %240
      %242 = vrot.lane.b32.xlu0 %v149, 126
      %v243 = vpop.permute.xlu0 %242
      %vm244 = vcmp.lt.s32.totalorder %v193, 126
      %v245 = vsel %vm244, %v233, %v239
      %v246 = vsel %vm244, %v235, %v241
      %v247 = vsel %vm244, %v237, %v243
      %v248 = vsel %vm244, %v239, %v233
      %v249 = vsel %vm244, %v241, %v235
      %v250 = vsel %vm244, %v243, %v237
      %s251 = scalar_lea.vmem %s0, 48
      %v252 = vld [vmem:[%s251] sm:$0xff]
      %v253 = vld [vmem:[%s251 + $0x8] sm:$0xff]
      %v254 = vld [vmem:[%s251 + $0x10] sm:$0xf]
      %256 = vset.pattern.permute.xlu0 0
      %257 = vperm.xlu0 %256, %v252
      %v258 = vpop.permute.xlu0 %257
      %261 = vset.pattern.permute.xlu0 0
      %262 = vperm.xlu0 %261, %v253
      %v263 = vpop.permute.xlu0 %262
      %266 = vset.pattern.permute.xlu0 0
      %267 = vperm.xlu0 %266, %v254
      %v268 = vpop.permute.xlu0 %267
      %v270 = vmul.f32 %v258, %v245
      %v271 = vmul.f32 %v258, %v248
      %v272 = vmul.f32 %v263, %v246
      %v273 = vmul.f32 %v263, %v249
      %v274 = vmul.f32 %v268, %v247
      %v275 = vmul.f32 %v268, %v250
      %v276 = vadd.f32 %v226, %v270
      %v277 = vadd.f32 %v227, %v271
      %v278 = vadd.f32 %v228, %v272
      %v279 = vadd.f32 %v229, %v273
      %v280 = vadd.f32 %v230, %v274
      %v281 = vadd.f32 %v231, %v275
      %282 = vrot.lane.b32.xlu0 %v144, 112
      %v283 = vpop.permute.xlu0 %282
      %284 = vrot.lane.b32.xlu0 %v146, 112
      %v285 = vpop.permute.xlu0 %284
      %286 = vrot.lane.b32.xlu0 %v148, 112
      %v287 = vpop.permute.xlu0 %286
      %288 = vrot.lane.b32.xlu0 %v145, 112
      %v289 = vpop.permute.xlu0 %288
      %290 = vrot.lane.b32.xlu0 %v147, 112
      %v291 = vpop.permute.xlu0 %290
      %292 = vrot.lane.b32.xlu0 %v149, 112
      %v293 = vpop.permute.xlu0 %292
      %vm294 = vcmp.lt.s32.totalorder %v193, 112
      %v295 = vsel %vm294, %v283, %v289
      %v296 = vsel %vm294, %v285, %v291
      %v297 = vsel %vm294, %v287, %v293
      %v298 = vsel %vm294, %v289, %v283
      %v299 = vsel %vm294, %v291, %v285
      %v300 = vsel %vm294, %v293, %v287
      %s301 = scalar_lea.vmem %s0, 72
      %v302 = vld [vmem:[%s301] sm:$0xff]
      %v303 = vld [vmem:[%s301 + $0x8] sm:$0xff]
      %v304 = vld [vmem:[%s301 + $0x10] sm:$0xf]
      %306 = vset.pattern.permute.xlu0 0
      %307 = vperm.xlu0 %306, %v302
      %v308 = vpop.permute.xlu0 %307
      %311 = vset.pattern.permute.xlu0 0
      %312 = vperm.xlu0 %311, %v303
      %v313 = vpop.permute.xlu0 %312
      %316 = vset.pattern.permute.xlu0 0
      %317 = vperm.xlu0 %316, %v304
      %v318 = vpop.permute.xlu0 %317
      %v320 = vmul.f32 %v308, %v295
      %v321 = vmul.f32 %v308, %v298
      %v322 = vmul.f32 %v313, %v296
      %v323 = vmul.f32 %v313, %v299
      %v324 = vmul.f32 %v318, %v297
      %v325 = vmul.f32 %v318, %v300
      %v326 = vadd.f32 %v276, %v320
      %v327 = vadd.f32 %v277, %v321
      %v328 = vadd.f32 %v278, %v322
      %v329 = vadd.f32 %v279, %v323
      %v330 = vadd.f32 %v280, %v324
      %v331 = vadd.f32 %v281, %v325
      %332 = vrot.lane.b32.xlu0 %v144, 111
      %v333 = vpop.permute.xlu0 %332
      %334 = vrot.lane.b32.xlu0 %v146, 111
      %v335 = vpop.permute.xlu0 %334
      %336 = vrot.lane.b32.xlu0 %v148, 111
      %v337 = vpop.permute.xlu0 %336
      %338 = vrot.lane.b32.xlu0 %v145, 111
      %v339 = vpop.permute.xlu0 %338
      %340 = vrot.lane.b32.xlu0 %v147, 111
      %v341 = vpop.permute.xlu0 %340
      %342 = vrot.lane.b32.xlu0 %v149, 111
      %v343 = vpop.permute.xlu0 %342
      %vm344 = vcmp.lt.s32.totalorder %v193, 111
      %v345 = vsel %vm344, %v333, %v339
      %v346 = vsel %vm344, %v335, %v341
      %v347 = vsel %vm344, %v337, %v343
      %v348 = vsel %vm344, %v339, %v333
      %v349 = vsel %vm344, %v341, %v335
      %v350 = vsel %vm344, %v343, %v337
      %s351 = scalar_lea.vmem %s0, 96
      %v352 = vld [vmem:[%s351] sm:$0xff]
      %v353 = vld [vmem:[%s351 + $0x8] sm:$0xff]
      %v354 = vld [vmem:[%s351 + $0x10] sm:$0xf]
      %356 = vset.pattern.permute.xlu0 0
      %357 = vperm.xlu0 %356, %v352
      %v358 = vpop.permute.xlu0 %357
      %361 = vset.pattern.permute.xlu0 0
      %362 = vperm.xlu0 %361, %v353
      %v363 = vpop.permute.xlu0 %362
      %366 = vset.pattern.permute.xlu0 0
      %367 = vperm.xlu0 %366, %v354
      %v368 = vpop.permute.xlu0 %367
      %v370 = vmul.f32 %v358, %v345
      %v371 = vmul.f32 %v358, %v348
      %v372 = vmul.f32 %v363, %v346
      %v373 = vmul.f32 %v363, %v349
      %v374 = vmul.f32 %v368, %v347
      %v375 = vmul.f32 %v368, %v350
      %v376 = vadd.f32 %v326, %v370
      %v377 = vadd.f32 %v327, %v371
      %v378 = vadd.f32 %v328, %v372
      %v379 = vadd.f32 %v329, %v373
      %v380 = vadd.f32 %v330, %v374
      %v381 = vadd.f32 %v331, %v375
      %382 = vrot.lane.b32.xlu0 %v144, 110
      %v383 = vpop.permute.xlu0 %382
      %384 = vrot.lane.b32.xlu0 %v146, 110
      %v385 = vpop.permute.xlu0 %384
      %386 = vrot.lane.b32.xlu0 %v148, 110
      %v387 = vpop.permute.xlu0 %386
      %388 = vrot.lane.b32.xlu0 %v145, 110
      %v389 = vpop.permute.xlu0 %388
      %390 = vrot.lane.b32.xlu0 %v147, 110
      %v391 = vpop.permute.xlu0 %390
      %392 = vrot.lane.b32.xlu0 %v149, 110
      %v393 = vpop.permute.xlu0 %392
      %vm394 = vcmp.lt.s32.totalorder %v193, 110
      %v395 = vsel %vm394, %v383, %v389
      %v396 = vsel %vm394, %v385, %v391
      %v397 = vsel %vm394, %v387, %v393
      %v398 = vsel %vm394, %v389, %v383
      %v399 = vsel %vm394, %v391, %v385
      %v400 = vsel %vm394, %v393, %v387
      %s401 = scalar_lea.vmem %s0, 120
      %v402 = vld [vmem:[%s401] sm:$0xff]
      %v403 = vld [vmem:[%s401 + $0x8] sm:$0xff]
      %v404 = vld [vmem:[%s401 + $0x10] sm:$0xf]
      %406 = vset.pattern.permute.xlu0 0
      %407 = vperm.xlu0 %406, %v402
      %v408 = vpop.permute.xlu0 %407
      %411 = vset.pattern.permute.xlu0 0
      %412 = vperm.xlu0 %411, %v403
      %v413 = vpop.permute.xlu0 %412
      %416 = vset.pattern.permute.xlu0 0
      %417 = vperm.xlu0 %416, %v404
      %v418 = vpop.permute.xlu0 %417
      %v420 = vmul.f32 %v408, %v395
      %v421 = vmul.f32 %v408, %v398
      %v422 = vmul.f32 %v413, %v396
      %v423 = vmul.f32 %v413, %v399
      %v424 = vmul.f32 %v418, %v397
      %v425 = vmul.f32 %v418, %v400
      %v426 = vadd.f32 %v376, %v420
      %v427 = vadd.f32 %v377, %v421
      %v428 = vadd.f32 %v378, %v422
      %v429 = vadd.f32 %v379, %v423
      %v430 = vadd.f32 %v380, %v424
      %v431 = vadd.f32 %v381, %v425
      %432 = vrot.lane.b32.xlu0 %v144, 96
      %v433 = vpop.permute.xlu0 %432
      %434 = vrot.lane.b32.xlu0 %v146, 96
      %v435 = vpop.permute.xlu0 %434
      %436 = vrot.lane.b32.xlu0 %v148, 96
      %v437 = vpop.permute.xlu0 %436
      %438 = vrot.lane.b32.xlu0 %v145, 96
      %v439 = vpop.permute.xlu0 %438
      %440 = vrot.lane.b32.xlu0 %v147, 96
      %v441 = vpop.permute.xlu0 %440
      %442 = vrot.lane.b32.xlu0 %v149, 96
      %v443 = vpop.permute.xlu0 %442
      %vm444 = vcmp.lt.s32.totalorder %v193, 96
      %v445 = vsel %vm444, %v433, %v439
      %v446 = vsel %vm444, %v435, %v441
      %v447 = vsel %vm444, %v437, %v443
      %v448 = vsel %vm444, %v439, %v433
      %v449 = vsel %vm444, %v441, %v435
      %v450 = vsel %vm444, %v443, %v437
      %s451 = scalar_lea.vmem %s0, 144
      %v452 = vld [vmem:[%s451] sm:$0xff]
      %v453 = vld [vmem:[%s451 + $0x8] sm:$0xff]
      %v454 = vld [vmem:[%s451 + $0x10] sm:$0xf]
      %456 = vset.pattern.permute.xlu0 0
      %457 = vperm.xlu0 %456, %v452
      %v458 = vpop.permute.xlu0 %457
      %461 = vset.pattern.permute.xlu0 0
      %462 = vperm.xlu0 %461, %v453
      %v463 = vpop.permute.xlu0 %462
      %466 = vset.pattern.permute.xlu0 0
      %467 = vperm.xlu0 %466, %v454
      %v468 = vpop.permute.xlu0 %467
      %v470 = vmul.f32 %v458, %v445
      %v471 = vmul.f32 %v458, %v448
      %v472 = vmul.f32 %v463, %v446
      %v473 = vmul.f32 %v463, %v449
      %v474 = vmul.f32 %v468, %v447
      %v475 = vmul.f32 %v468, %v450
      %v476 = vadd.f32 %v426, %v470
      %v477 = vadd.f32 %v427, %v471
      %v478 = vadd.f32 %v428, %v472
      %v479 = vadd.f32 %v429, %v473
      %v480 = vadd.f32 %v430, %v474
      %v481 = vadd.f32 %v431, %v475
      %482 = vrot.lane.b32.xlu0 %v144, 95
      %v483 = vpop.permute.xlu0 %482
      %484 = vrot.lane.b32.xlu0 %v146, 95
      %v485 = vpop.permute.xlu0 %484
      %486 = vrot.lane.b32.xlu0 %v148, 95
      %v487 = vpop.permute.xlu0 %486
      %488 = vrot.lane.b32.xlu0 %v145, 95
      %v489 = vpop.permute.xlu0 %488
      %490 = vrot.lane.b32.xlu0 %v147, 95
      %v491 = vpop.permute.xlu0 %490
      %492 = vrot.lane.b32.xlu0 %v149, 95
      %v493 = vpop.permute.xlu0 %492
      %vm494 = vcmp.lt.s32.totalorder %v193, 95
      %v495 = vsel %vm494, %v483, %v489
      %v496 = vsel %vm494, %v485, %v491
      %v497 = vsel %vm494, %v487, %v493
      %v498 = vsel %vm494, %v489, %v483
      %v499 = vsel %vm494, %v491, %v485
      %v500 = vsel %vm494, %v493, %v487
      %s501 = scalar_lea.vmem %s0, 168
      %v502 = vld [vmem:[%s501] sm:$0xff]
      %v503 = vld [vmem:[%s501 + $0x8] sm:$0xff]
      %v504 = vld [vmem:[%s501 + $0x10] sm:$0xf]
      %506 = vset.pattern.permute.xlu0 0
      %507 = vperm.xlu0 %506, %v502
      %v508 = vpop.permute.xlu0 %507
      %511 = vset.pattern.permute.xlu0 0
      %512 = vperm.xlu0 %511, %v503
      %v513 = vpop.permute.xlu0 %512
      %516 = vset.pattern.permute.xlu0 0
      %517 = vperm.xlu0 %516, %v504
      %v518 = vpop.permute.xlu0 %517
      %v520 = vmul.f32 %v508, %v495
      %v521 = vmul.f32 %v508, %v498
      %v522 = vmul.f32 %v513, %v496
      %v523 = vmul.f32 %v513, %v499
      %v524 = vmul.f32 %v518, %v497
      %v525 = vmul.f32 %v518, %v500
      %v526 = vadd.f32 %v476, %v520
      %v527 = vadd.f32 %v477, %v521
      %v528 = vadd.f32 %v478, %v522
      %v529 = vadd.f32 %v479, %v523
      %v530 = vadd.f32 %v480, %v524
      %v531 = vadd.f32 %v481, %v525
      %532 = vrot.lane.b32.xlu0 %v144, 94
      %v533 = vpop.permute.xlu0 %532
      %534 = vrot.lane.b32.xlu0 %v146, 94
      %v535 = vpop.permute.xlu0 %534
      %536 = vrot.lane.b32.xlu0 %v148, 94
      %v537 = vpop.permute.xlu0 %536
      %538 = vrot.lane.b32.xlu0 %v145, 94
      %v539 = vpop.permute.xlu0 %538
      %540 = vrot.lane.b32.xlu0 %v147, 94
      %v541 = vpop.permute.xlu0 %540
      %542 = vrot.lane.b32.xlu0 %v149, 94
      %v543 = vpop.permute.xlu0 %542
      %vm544 = vcmp.lt.s32.totalorder %v193, 94
      %v545 = vsel %vm544, %v533, %v539
      %v546 = vsel %vm544, %v535, %v541
      %v547 = vsel %vm544, %v537, %v543
      %v548 = vsel %vm544, %v539, %v533
      %v549 = vsel %vm544, %v541, %v535
      %v550 = vsel %vm544, %v543, %v537
      %s551 = scalar_lea.vmem %s0, 192
      %v552 = vld [vmem:[%s551] sm:$0xff]
      %v553 = vld [vmem:[%s551 + $0x8] sm:$0xff]
      %v554 = vld [vmem:[%s551 + $0x10] sm:$0xf]
      %556 = vset.pattern.permute.xlu0 0
      %557 = vperm.xlu0 %556, %v552
      %v558 = vpop.permute.xlu0 %557
      %561 = vset.pattern.permute.xlu0 0
      %562 = vperm.xlu0 %561, %v553
      %v563 = vpop.permute.xlu0 %562
      %566 = vset.pattern.permute.xlu0 0
      %567 = vperm.xlu0 %566, %v554
      %v568 = vpop.permute.xlu0 %567
      %v570 = vmul.f32 %v558, %v545
      %v571 = vmul.f32 %v558, %v548
      %v572 = vmul.f32 %v563, %v546
      %v573 = vmul.f32 %v563, %v549
      %v574 = vmul.f32 %v568, %v547
      %v575 = vmul.f32 %v568, %v550
      %v576 = vadd.f32 %v526, %v570
      %v577 = vadd.f32 %v527, %v571
      %v578 = vadd.f32 %v528, %v572
      %v579 = vadd.f32 %v529, %v573
      %v580 = vadd.f32 %v530, %v574
      %v581 = vadd.f32 %v531, %v575
      %582 = vst [vmem:[%s143] sm:$0xff] %v576
      %583 = vst [vmem:[%s143 + $0x8] sm:$0xff] %v577
      %584 = vst [vmem:[%s143 + $0x10] sm:$0xff] %v578
      %585 = vst [vmem:[%s143 + $0x18] sm:$0xff] %v579
      %586 = vst [vmem:[%s143 + $0x20] sm:$0xf] %v580
      %587 = vst [vmem:[%s143 + $0x28] sm:$0xf] %v581
      %p588 = scmp.lt.s32.totalorder %s13, 1
      %s589 = scalar_select %p588, %s13, 1
      %s590 = smul.addr %s589, 6
      %s591 = smul.addr %s590, 8
      %s592 = scalar_lea.vmem %s2, %s591
      // Predicated region
      $region29: #{tpu_custom_call.1} parent=27 // pred_check
        %p593 = pneg %p78
      $region30: #{tpu_custom_call.1} parent=27 // pred_check_branch
        %595 = sbr.rel (%p593) target = $region32
      $region31: #{tpu_custom_call.1} parent=27 // pred_region
        _
      $region32: #{tpu_custom_call.1} parent=27 // pred_fallthru
        _
    $region28: #{tpu_custom_call.1} parent=5 // pred_fallthru
      _
    %p596 = scmp.le.s32.totalorder 2, %s8
    // Predicated region
    $region33: #{tpu_custom_call.1} parent=5 // pred_check
      %p597 = pneg %p596
    $region34: #{tpu_custom_call.1} parent=5 // pred_check_branch
      %599 = sbr.rel (%p597) target = $region36
    $region35: #{tpu_custom_call.1} parent=5 // pred_region
      %s600 = ssub.s32 %s8, 2
      // Predicated region
      $region37: #{tpu_custom_call.1} parent=35 // pred_check
        %p601 = pneg %p84
      $region38: #{tpu_custom_call.1} parent=35 // pred_check_branch
        %603 = sbr.rel (%p601) target = $region40
      $region39: #{tpu_custom_call.1} parent=35 // pred_region
        %p604 = scmp.lt.s32.totalorder %s14, 1
        %s605 = scalar_select %p604, %s14, 1
        %s606 = smul.addr %s605, 6
        %s607 = smul.addr %s606, 8
        %s608 = scalar_lea.vmem %s2, %s607
      $region40: #{tpu_custom_call.1} parent=35 // pred_fallthru
        _
    $region36: #{tpu_custom_call.1} parent=5 // pred_fallthru
      _
  $region6: #{tpu_custom_call.1} parent=0 // loop_footer
    %s12 = sadd.s32 1, %s8
  $region7: #{tpu_custom_call.1} parent=0 // loop_footer_branch
    %7 = sbr.rel target = $region3
  $region8: #{tpu_custom_call.1} parent=0 // loop_exit
    _

</llo_original>
